<compile_context>
chip_gen: v6e
topology: v6e:2x2x1
jax: 0.10.0
libtpu: 0.0.40
codegen_flags: <defaults>
</compile_context>

<pallas_src>
import functools

import jax
import jax.numpy as jnp
from jax.experimental import pallas as pl
from jax.experimental.pallas import tpu as pltpu


# ----------------------------------------------------------------------------- kernels


def _fused_eca_kernel(w_ref, b_ref, x_ref, o_ref, *, inv_hw):
    # Global average pool over the (lane) spatial axis. Read x_ref directly (streamed
    # from VMEM); only the (TB, C, 1) pooled reduction is materialized in f32.
    y = jnp.sum(x_ref[...], axis=-1, keepdims=True, dtype=jnp.float32) * inv_hw

    # Conv1d(1, 1, kernel_size=3, padding=1) along the channel (sublane) axis.
    # PyTorch conv = cross-correlation: out[c] = w0*y[c-1] + w1*y[c] + w2*y[c+1] + b.
    # The shift is done with concat/slice on the tiny (TB, C, 1) pooled vector (a few
    # vregs); a pltpu.roll(axis=1) variant would ride the XLU instead, but sublane-roll
    # lowering for C not a multiple of 8 is not guaranteed and the relayout cost here
    # is negligible relative to the HBM-bound stream.
    w0 = w_ref[0]
    w1 = w_ref[1]
    w2 = w_ref[2]
    b = b_ref[0]
    tb = y.shape[0]
    zero = jnp.zeros((tb, 1, 1), jnp.float32)
    y_prev = jnp.concatenate([zero, y[:, :-1, :]], axis=1)   # y[c-1], zero padded
    y_next = jnp.concatenate([y[:, 1:, :], zero], axis=1)    # y[c+1], zero padded
    att = jax.nn.sigmoid(w0 * y_prev + w1 * y + w2 * y_next + b)  # (TB, C, 1) f32

    # Broadcast scale. Re-read x_ref (vld slots are nowhere near binding) so the big
    # tile never has a long vreg live range across the reduce/conv/sigmoid.
    # Keep the multiply in native dtype for >=16-bit inputs; upconvert only sub-byte.
    mul_dtype = x_ref.dtype if jnp.dtype(x_ref.dtype).itemsize >= 2 else jnp.float32
    o_ref[...] = (x_ref[...].astype(mul_dtype) * att.astype(mul_dtype)).astype(o_ref.dtype)


def _pool_kernel(x_ref, sum_ref, *, hw, t_hw):
    # Streaming global-average-pool partial sums; output block is resident in VMEM
    # across the (arbitrary) chunk axis.
    j = pl.program_id(1)

    @pl.when(j == 0)
    def _():
        sum_ref[...] = jnp.zeros_like(sum_ref)

    # Mask lanes past the true HW extent in the (padded) last chunk.
    lane = j * t_hw + jax.lax.broadcasted_iota(jnp.int32, x_ref.shape, 2)
    x = jnp.where(lane < hw, x_ref[...], jnp.zeros((), x_ref.dtype))
    sum_ref[...] += jnp.sum(x, axis=-1, keepdims=True, dtype=jnp.float32)


def _scale_kernel(att_ref, x_ref, o_ref):
    att = att_ref[...]                                       # (1, C, 1) f32
    mul_dtype = x_ref.dtype if jnp.dtype(x_ref.dtype).itemsize >= 2 else jnp.float32
    o_ref[...] = (x_ref[...].astype(mul_dtype) * att.astype(mul_dtype)).astype(o_ref.dtype)


# ----------------------------------------------------------------------------- tuning


def _tpu_defaults():
    """Generation-aware tile / VMEM targets. Conservative (v7x-like) on failure."""
    vmem_bytes = 64 * 2**20
    try:
        info = pltpu.get_tpu_info()
        vmem_bytes = int(getattr(info, "vmem_capacity_bytes", vmem_bytes))
    except Exception:
        pass
    if vmem_bytes <= 96 * 2**20:
        # v7x-like: 64 MiB per TensorCore, 2 TCs (megacore). Keep >= 4 steps per TC.
        return dict(target_tile_bytes=4 * 2**20,
                    fused_max_tile_bytes=8 * 2**20,
                    vmem_cap_bytes=40 * 2**20,
                    min_grid_steps=8)
    # v5e / v6e: 128 MiB VMEM, single TC.
    return dict(target_tile_bytes=8 * 2**20,
                fused_max_tile_bytes=16 * 2**20,
                vmem_cap_bytes=80 * 2**20,
                min_grid_steps=4)


def _choose_batch_tile(B, per_batch_bytes, target_tile_bytes, min_grid_steps):
    """Largest divisor of B whose tile is <= target, keeping >= min_grid_steps steps
    so each TensorCore has several blocks to pipeline (prefetch i+1 / writeback i-1)."""
    max_tb = max(1, min(B, target_tile_bytes // max(1, per_batch_bytes)))
    if B >= min_grid_steps:
        max_tb = min(max_tb, B // min_grid_steps)
    max_tb = max(1, max_tb)
    for tb in range(int(max_tb), 0, -1):
        if B % tb == 0:
            return tb
    return 1


# ----------------------------------------------------------------------------- wrappers


def _eca_fused(x_flat, w, b, hw, cfg):
    B, C, _ = x_flat.shape
    elt = jnp.dtype(x_flat.dtype).itemsize
    per_batch = C * hw * elt
    tb = _choose_batch_tile(B, per_batch, cfg["target_tile_bytes"], cfg["min_grid_steps"])
    tile_bytes = tb * per_batch
    # Double-buffered input + double-buffered output ~= 4x tile (+ tiny pooled vec).
    vmem_limit = int(min(cfg["vmem_cap_bytes"], max(32 * 2**20, 5 * tile_bytes)))

    kernel = functools.partial(_fused_eca_kernel, inv_hw=1.0 / hw)
    return pl.pallas_call(
        kernel,
        out_shape=jax.ShapeDtypeStruct((B, C, hw), x_flat.dtype),
        grid_spec=pltpu.PrefetchScalarGridSpec(
            num_scalar_prefetch=0,
            grid=(B // tb,),
            in_specs=[
                pl.BlockSpec(memory_space=pltpu.MemorySpace.SMEM),   # conv weight (3,)
                pl.BlockSpec(memory_space=pltpu.MemorySpace.SMEM),   # conv bias (1,)
                # Full-extent last dim => no wrapper pad needed, lane-dense stores
                # except the single partial tail tile.
                pl.BlockSpec((tb, C, hw), lambda i: (i, 0, 0)),
            ],
            out_specs=pl.BlockSpec((tb, C, hw), lambda i: (i, 0, 0)),
        ),
        compiler_params=pltpu.CompilerParams(
            dimension_semantics=("parallel",),
            vmem_limit_bytes=vmem_limit),
    )(w, b, x_flat)


def _eca_chunked(x_flat, w, b, hw, cfg):
    """Large feature maps: stream 128-multiple HW chunks (pool pass + scale pass)."""
    B, C, _ = x_flat.shape
    elt = jnp.dtype(x_flat.dtype).itemsize
    t_hw = max(128, (cfg["target_tile_bytes"] // max(1, C * elt)) // 128 * 128)
    t_hw = min(t_hw, ((hw + 127) // 128) * 128)
    n_chunks = pl.cdiv(hw, t_hw)
    chunk_bytes = C * t_hw * elt
    vmem_limit = int(min(cfg["vmem_cap_bytes"], max(32 * 2**20, 6 * chunk_bytes)))

    # Pass 1: pooled f32 sums, accumulator resident across the chunk axis.
    sums = pl.pallas_call(
        functools.partial(_pool_kernel, hw=hw, t_hw=t_hw),
        out_shape=jax.ShapeDtypeStruct((B, C, 1), jnp.float32),
        grid_spec=pltpu.PrefetchScalarGridSpec(
            num_scalar_prefetch=0,
            grid=(B, n_chunks),
            in_specs=[pl.BlockSpec((1, C, t_hw), lambda i, j: (i, 0, j))],
            out_specs=pl.BlockSpec((1, C, 1), lambda i, j: (i, 0, 0)),
        ),
        compiler_params=pltpu.CompilerParams(
            dimension_semantics=("parallel", "arbitrary"),
            vmem_limit_bytes=vmem_limit),
    )(x_flat)

    # Conv1d(k=3, pad=1) + sigmoid on the tiny (B, C) pooled vector: plain JAX.
    y = sums[:, :, 0] / hw
    yp = jnp.pad(y, ((0, 0), (1, 1)))
    att = jax.nn.sigmoid(w[0] * yp[:, :C] + w[1] * yp[:, 1:C + 1]
                         + w[2] * yp[:, 2:C + 2] + b[0])
    att = att.reshape(B, C, 1).astype(jnp.float32)

    # Pass 2: stream chunks again and apply the per-(B, C) scale.
    return pl.pallas_call(
        _scale_kernel,
        out_shape=jax.ShapeDtypeStruct((B, C, hw), x_flat.dtype),
        grid_spec=pltpu.PrefetchScalarGridSpec(
            num_scalar_prefetch=0,
            grid=(B, n_chunks),
            in_specs=[
                pl.BlockSpec((1, C, 1), lambda i, j: (i, 0, 0)),
                pl.BlockSpec((1, C, t_hw), lambda i, j: (i, 0, j)),
            ],
            out_specs=pl.BlockSpec((1, C, t_hw), lambda i, j: (i, 0, j)),
        ),
        compiler_params=pltpu.CompilerParams(
            dimension_semantics=("parallel", "parallel"),
            vmem_limit_bytes=vmem_limit),
    )(att, x_flat)


def eca_attention(x, conv_w, conv_b, *, force_chunked=False):
    """x: (B, C, H, W); conv_w: Conv1d(1,1,3) weight flattened to (3,); conv_b: (1,)."""
    B, C, H, W = x.shape
    hw = H * W
    x_flat = x.reshape(B, C, hw)          # bitcast reshape, no HBM copy / no padding

    w = conv_w.reshape(-1).astype(jnp.float32)
    b = conv_b.reshape(-1).astype(jnp.float32)

    cfg = _tpu_defaults()
    elt = jnp.dtype(x.dtype).itemsize
    per_batch = C * hw * elt

    # NOTE: for C < 8 (f32) / 16 (bf16) channels the sublane tile is partly padding;
    # accepted knowingly — typical ECA channel counts (64-2048) are unaffected.
    if (not force_chunked) and per_batch <= cfg["fused_max_tile_bytes"]:
        out_flat = _eca_fused(x_flat, w, b, hw, cfg)
    else:
        out_flat = _eca_chunked(x_flat, w, b, hw, cfg)
    return out_flat.reshape(B, C, H, W)


def eca_reference(x, conv_w, conv_b):
    # Pure-JAX reference mirroring the PyTorch forward.
    B, C, H, W = x.shape
    y = jnp.mean(x, axis=(2, 3))                           # (B, C)  AdaptiveAvgPool2d(1)
    yp = jnp.pad(y, ((0, 0), (1, 1)))                      # zero padding=1
    conv = (conv_w[0] * yp[:, 0:C]
            + conv_w[1] * yp[:, 1:C + 1]
            + conv_w[2] * yp[:, 2:C + 2]
            + conv_b[0])                                   # (B, C)
    att = jax.nn.sigmoid(conv)
    return x * att[:, :, None, None]


if __name__ == "__main__":
    key = jax.random.PRNGKey(0)
    kx, kw, kb = jax.random.split(key, 3)

    # Conv1d(1, 1, kernel_size=3, padding=1): weight (1,1,3) flattened to (3,); bias (1,).
    conv_w = jax.random.normal(kw, (3,), dtype=jnp.float32) * 0.5
    conv_b = jax.random.normal(kb, (1,), dtype=jnp.float32) * 0.1

    # Main test: fused path, 128-multiple spatial size.
    B, C, H, W = 2, 4, 16, 16
    x = jax.random.normal(kx, (B, C, H, W), dtype=jnp.float32)
    out = eca_attention(x, conv_w, conv_b)
    jax.block_until_ready(out)
    ref = eca_reference(x, conv_w, conv_b)
    assert out.shape == x.shape and out.dtype == x.dtype
    assert jnp.allclose(out, ref, atol=1e-5, rtol=1e-5), "fused path mismatch"

    # Non-128-multiple spatial size: no wrapper pad/slice, full-extent last-dim block.
    x2 = jax.random.normal(kx, (2, 8, 13, 13), dtype=jnp.float32)
    ref2 = eca_reference(x2, conv_w, conv_b)
    out2 = eca_attention(x2, conv_w, conv_b)
    jax.block_until_ready(out2)
    assert jnp.allclose(out2, ref2, atol=1e-5, rtol=1e-5), "fused non-aligned mismatch"

    # Force the large-feature-map chunked fallback (pool pass + scale pass) and check it.
    out3 = eca_attention(x2, conv_w, conv_b, force_chunked=True)
    jax.block_until_ready(out3)
    assert jnp.allclose(out3, ref2, atol=1e-5, rtol=1e-5), "chunked path mismatch"

    print("KERNEL_OK")
</pallas_src>

<mosaic_0001>
module attributes {stable_mosaic.version = 11 : i64} {
  func.func @_fused_eca_kernel(%arg0: i32, %arg1: memref<3xf32, #tpu.memory_space<smem>>, %arg2: memref<1xf32, #tpu.memory_space<smem>>, %arg3: memref<2x4x256xf32, #tpu.memory_space<vmem>>, %arg4: memref<2x4x256xf32, #tpu.memory_space<vmem>>) attributes {dimension_semantics = [#tpu.dimension_semantics<parallel>], iteration_bounds = array<i64: 1>, scalar_prefetch = 0 : i64, scratch_operands = 0 : i64, tpu.core_type = #tpu.core_type<tc>, window_params = [{transform_indices = @transform_0, window_bounds = array<i64: 3>}, {transform_indices = @transform_1, window_bounds = array<i64: 1>}, {transform_indices = @transform_2, window_bounds = array<i64: 2, 4, 256>}, {transform_indices = @transform_3, window_bounds = array<i64: 2, 4, 256>}]} {
    %c0 = arith.constant 0 : index
    %c0_0 = arith.constant 0 : index
    %c0_1 = arith.constant 0 : index
    %0 = vector.load %arg3[%c0, %c0_0, %c0_1] : memref<2x4x256xf32, #tpu.memory_space<vmem>>, vector<2x4x256xf32>
    %cst = arith.constant dense<0.000000e+00> : vector<2x4xf32>
    %1 = vector.multi_reduction <add>, %0, %cst [2] : vector<2x4x256xf32> to vector<2x4xf32>
    %2 = vector.shape_cast %1 : vector<2x4xf32> to vector<2x4x1xf32>
    %cst_2 = arith.constant 3.906250e-03 : f32
    %3 = vector.broadcast %cst_2 : f32 to vector<2x4x1xf32>
    %4 = arith.mulf %2, %3 : vector<2x4x1xf32>
    %c0_3 = arith.constant 0 : index
    %5 = memref.load %arg1[%c0_3] : memref<3xf32, #tpu.memory_space<smem>>
    %c1 = arith.constant 1 : index
    %6 = memref.load %arg1[%c1] : memref<3xf32, #tpu.memory_space<smem>>
    %c2 = arith.constant 2 : index
    %7 = memref.load %arg1[%c2] : memref<3xf32, #tpu.memory_space<smem>>
    %c0_4 = arith.constant 0 : index
    %8 = memref.load %arg2[%c0_4] : memref<1xf32, #tpu.memory_space<smem>>
    %cst_5 = arith.constant 0.000000e+00 : f32
    %9 = vector.broadcast %cst_5 : f32 to vector<2x1x1xf32>
    %10 = vector.extract_strided_slice %4 {offsets = [0, 0, 0], sizes = [2, 3, 1], strides = [1, 1, 1]} : vector<2x4x1xf32> to vector<2x3x1xf32>
    %11 = tpu.concatenate %9, %10 in 1 : vector<2x1x1xf32>, vector<2x3x1xf32> -> vector<2x4x1xf32>
    %12 = vector.extract_strided_slice %4 {offsets = [0, 1, 0], sizes = [2, 3, 1], strides = [1, 1, 1]} : vector<2x4x1xf32> to vector<2x3x1xf32>
    %13 = tpu.concatenate %12, %9 in 1 : vector<2x3x1xf32>, vector<2x1x1xf32> -> vector<2x4x1xf32>
    %14 = vector.broadcast %5 : f32 to vector<2x4x1xf32>
    %15 = arith.mulf %14, %11 : vector<2x4x1xf32>
    %16 = vector.broadcast %6 : f32 to vector<2x4x1xf32>
    %17 = arith.mulf %16, %4 : vector<2x4x1xf32>
    %18 = arith.addf %15, %17 : vector<2x4x1xf32>
    %19 = vector.broadcast %7 : f32 to vector<2x4x1xf32>
    %20 = arith.mulf %19, %13 : vector<2x4x1xf32>
    %21 = arith.addf %18, %20 : vector<2x4x1xf32>
    %22 = vector.broadcast %8 : f32 to vector<2x4x1xf32>
    %23 = arith.addf %21, %22 : vector<2x4x1xf32>
    %24 = arith.negf %23 : vector<2x4x1xf32>
    %25 = math.exp %24 : vector<2x4x1xf32>
    %cst_6 = arith.constant 1.000000e+00 : f32
    %26 = vector.broadcast %cst_6 : f32 to vector<2x4x1xf32>
    %27 = arith.addf %26, %25 : vector<2x4x1xf32>
    %28 = arith.divf %26, %27 : vector<2x4x1xf32>
    %c0_7 = arith.constant 0 : index
    %c0_8 = arith.constant 0 : index
    %c0_9 = arith.constant 0 : index
    %29 = vector.load %arg3[%c0_7, %c0_8, %c0_9] : memref<2x4x256xf32, #tpu.memory_space<vmem>>, vector<2x4x256xf32>
    %30 = vector.broadcast %28 : vector<2x4x1xf32> to vector<2x4x256xf32>
    %31 = arith.mulf %29, %30 : vector<2x4x256xf32>
    %c0_10 = arith.constant 0 : index
    %c0_11 = arith.constant 0 : index
    %c0_12 = arith.constant 0 : index
    %32 = vector.load %arg4[%c0_10, %c0_11, %c0_12] : memref<2x4x256xf32, #tpu.memory_space<vmem>>, vector<2x4x256xf32>
    tpu.vector_store %arg4[%c0_10, %c0_11, %c0_12], %31 {strides = array<i32>} : memref<2x4x256xf32, #tpu.memory_space<vmem>>, vector<2x4x256xf32>,
    return
  }
  func.func @transform_0(%arg0: i32) -> i32 {
    %c0_i32 = arith.constant 0 : i32
    %c0_i32_0 = arith.constant 0 : i32
    return %c0_i32 : i32
  }
  func.func @transform_1(%arg0: i32) -> i32 {
    %c0_i32 = arith.constant 0 : i32
    %c0_i32_0 = arith.constant 0 : i32
    return %c0_i32 : i32
  }
  func.func @transform_2(%arg0: i32) -> (i32, i32, i32) {
    %c0_i32 = arith.constant 0 : i32
    %c0_i32_0 = arith.constant 0 : i32
    %c0_i32_1 = arith.constant 0 : i32
    return %arg0, %c0_i32, %c0_i32_0 : i32, i32, i32
  }
  func.func @transform_3(%arg0: i32) -> (i32, i32, i32) {
    %c0_i32 = arith.constant 0 : i32
    %c0_i32_0 = arith.constant 0 : i32
    %c0_i32_1 = arith.constant 0 : i32
    return %arg0, %c0_i32, %c0_i32_0 : i32, i32, i32
  }
}

</mosaic_0001>

<llo_original>
// kernel: tpu_custom_call.1
$region0: #{tpu_custom_call.1}
  #allocation0 [shape = 'u32[]', space=smem, size = 0x4, offset = 0x4, fixed_abs, tag = 'smem constant byte address 0x4 - core index']
  #allocation1 [shape = 'u32[144,128]{1,0:T(1,128)}', space=vmem, size = 0x12000, scoped, tag = 'internal scratch']
  #allocation2 [shape = 'f32[1]{0:T(128)S(6)}', space=smem, size = 0x200, scoped, tag = 'scoped memory for tpu_custom_call.1']
  %s0 = inlined_call_operand.vmem [shape: f32[3], index: 0, kind: input, shape index: {}]
  %s1 = inlined_call_operand.<no memory space> [shape: f32[1], index: 1, kind: input, shape index: {}]
  %s2 = inlined_call_operand.hbm [shape: f32[2,4,256], index: 2, kind: input, shape index: {}]
  %s3 = inlined_call_operand.hbm [shape: f32[2,4,256], index: 3, kind: output, shape index: {}]
  %s4 = sld [smem:[#allocation0]]
  $region30: #{tpu_custom_call.1} parent=0
    _
  %s6 = ssub.s32 1, %s4
  %s7 = scalar_select 0, %s6, %s4
  %8 = sst [smem:[#allocation2]] %s1
  $region1: #{tpu_custom_call.1} parent=0
    #allocation3 [shape = 'u8[512]{0}', space=smem, size = 0x200, scoped, tag = 'input window, operand 0, single buffered']
    #allocation4 [shape = 's32[1]{0}', space=sflag, size = 0x4, scoped, tag = 'scoped memory for tpu_custom_call.1']
    #allocation5 [shape = 's32[1]{0}', space=sflag, size = 0x4, scoped, tag = 'scoped memory for tpu_custom_call.1']
    #allocation6 [shape = 's32[1]{0}', space=sflag, size = 0x4, scoped, tag = 'scoped memory for tpu_custom_call.1']
    #allocation7 [shape = 'u8[8192]{0}', space=vmem, size = 0x2000, scoped, tag = 'input window, operand 2, single buffered']
    #allocation8 [shape = 'u8[8192]{0}', space=vmem, size = 0x2000, scoped, tag = 'output window, operand 0, single buffered']
    %9 = vsyncpa [#allocation6], 0
    %10 = vsyncpa [#allocation4], 0
    %11 = vsyncpa [#allocation5], 0
    // Predicated region
    $region2: #{tpu_custom_call.1} parent=1 // pred_check
      _
    $region3: #{tpu_custom_call.1} parent=1 // pred_check_branch
      %13 = sbr.rel (0) target = $region5
    $region4: #{tpu_custom_call.1} parent=1 // pred_region
      %s15 = ssub.s32 16, 16
      %16 = vsyncadd [#allocation6], %s15
      %s18 = sshll.u32 %s0, 4
      %s19 = int_to_ptr.vmem [resolvable:$true] %s18
      %21 = dma.vmem_to_smem %s19, 16, [#allocation3], [#allocation6]
    $region5: #{tpu_custom_call.1} parent=1 // pred_fallthru
      _
    // Predicated region
    $region6: #{tpu_custom_call.1} parent=1 // pred_check
      _
    $region7: #{tpu_custom_call.1} parent=1 // pred_check_branch
      %23 = sbr.rel (0) target = $region9
    $region8: #{tpu_custom_call.1} parent=1 // pred_region
      _
    $region9: #{tpu_custom_call.1} parent=1 // pred_fallthru
      _
    // Predicated region
    $region10: #{tpu_custom_call.1} parent=1 // pred_check
      _
    $region11: #{tpu_custom_call.1} parent=1 // pred_check_branch
      %25 = sbr.rel (0) target = $region13
    $region12: #{tpu_custom_call.1} parent=1 // pred_region
      %s27 = ssub.s32 256, 256
      %28 = vsyncadd [#allocation4], %s27
      %s29 = sshll.u32 [#allocation7], 4
      %s30 = int_to_ptr.vmem [resolvable:$true] %s29
      %35 = dma.hbm_to_vmem [thread:$0]  %s2, 256, %s30, [#allocation4], 128, 128, 8
    $region13: #{tpu_custom_call.1} parent=1 // pred_fallthru
      _
    // Predicated region
    $region14: #{tpu_custom_call.1} parent=1 // pred_check
      _
    $region15: #{tpu_custom_call.1} parent=1 // pred_check_branch
      %37 = sbr.rel (0) target = $region17
    $region16: #{tpu_custom_call.1} parent=1 // pred_region
      %38 = dma.done [#allocation6], 16
    $region17: #{tpu_custom_call.1} parent=1 // pred_fallthru
      _
    // Predicated region
    $region18: #{tpu_custom_call.1} parent=1 // pred_check
      _
    $region19: #{tpu_custom_call.1} parent=1 // pred_check_branch
      %40 = sbr.rel (0) target = $region21
    $region20: #{tpu_custom_call.1} parent=1 // pred_region
      %41 = dma.done [#allocation4], 256
    $region21: #{tpu_custom_call.1} parent=1 // pred_fallthru
      _
    %42 = sfence
    %v43 = vld [vmem:[#allocation7] sm:$0xff]
    %v44 = vld [vmem:[#allocation7 + $0x8] sm:$0xff]
    %v47 = vcombine.high %v43, %v43
    %v48 = vcombine.high %v44, %v44
    %vm51 = vcmask 1043456
    %v52 = vsel %vm51, %v43, 0.0
    %v53 = vsel %vm51, %v47, 0.0
    %v54 = vadd.f32 %v52, %v53
    %55 = vadd.xlane.f32.xlu0 %v54
    %v56 = vpop.xlane.xlu0 %55
    %v57 = vsel %vm51, %v44, 0.0
    %v58 = vsel %vm51, %v48, 0.0
    %v59 = vadd.f32 %v57, %v58
    %60 = vadd.xlane.f32.xlu0 %v59
    %v61 = vpop.xlane.xlu0 %60
    %v62 = vmul.f32 %v56, 0.00390625
    %v63 = vmul.f32 %v61, 0.00390625
    %s64 = sld [smem:[#allocation3]]
    %s65 = sld [smem:[#allocation3 + $0x1]]
    %s66 = sld [smem:[#allocation3 + $0x2]]
    %s67 = sld [smem:[#allocation2]]
    %v70 = vrot.slane %v62, 7
    %v71 = vrot.slane %v63, 7
    %vm74 = vcmask 1040384
    %v75 = vsel %vm74, 0.0, %v70
    %v76 = vsel %vm74, 0.0, %v71
    %v77 = vrot.slane %v62, 1
    %v78 = vrot.slane %v63, 1
    %vm81 = vcmask 1042432
    %v82 = vsel %vm81, %v77, 0.0
    %v83 = vsel %vm81, %v78, 0.0
    %v84 = vstv %s64
    %v85 = vmul.f32 %v84, %v75
    %v86 = vmul.f32 %v84, %v76
    %v87 = vstv %s65
    %v88 = vmul.f32 %v87, %v62
    %v89 = vmul.f32 %v87, %v63
    %v90 = vadd.f32 %v85, %v88
    %v91 = vadd.f32 %v86, %v89
    %v92 = vstv %s66
    %v93 = vmul.f32 %v92, %v82
    %v94 = vmul.f32 %v92, %v83
    %v95 = vadd.f32 %v90, %v93
    %v96 = vadd.f32 %v91, %v94
    %v97 = vstv %s67
    %v98 = vadd.f32 %v95, %v97
    %v99 = vadd.f32 %v96, %v97
    %v100 = vxor.u32 %v98, 2147483648
    %v101 = vxor.u32 %v99, 2147483648
    %v102 = vmul.f32 %v100, 1.442695
    %v103 = vpow.pop %v102
    %v104 = vmul.f32 %v101, 1.442695
    %v105 = vpow.pop %v104
    %v106 = vadd.f32 %v103, 1.0
    %v107 = vadd.f32 %v105, 1.0
    %v108 = vrcp.pop %v106
    %v109 = vmul.f32 1.0, %v108
    %v110 = vrcp.pop %v107
    %v111 = vmul.f32 1.0, %v110
    %113 = vset.pattern.permute.xlu0 0
    %114 = vperm.xlu0 %113, %v109
    %v115 = vpop.permute.xlu0 %114
    %117 = vset.pattern.permute.xlu0 0
    %118 = vperm.xlu0 %117, %v111
    %v119 = vpop.permute.xlu0 %118
    %v121 = vunpack.c.l.s4 839922192
    %v122 = vunpack.c.0.s8 %v121
    %v123 = vlaneseq
    %v124 = vshrl.u32 %v123, 7
    %v125 = vsub.s32 %v122, %v124
    %v126 = vrot.slane %v115, %v125
    %v128 = vunpack.c.l.s4 839922192
    %v129 = vunpack.c.0.s8 %v128
    %v130 = vlaneseq
    %v131 = vshrl.u32 %v130, 7
    %v132 = vsub.s32 %v129, %v131
    %v133 = vrot.slane %v119, %v132
    %v136 = vmul.f32 %v43, %v126
    %v137 = vmul.f32 %v44, %v133
    %138 = vst [vmem:[#allocation8] sm:$0xff] %v136
    %139 = vst [vmem:[#allocation8 + $0x8] sm:$0xff] %v137
    // Predicated region
    $region22: #{tpu_custom_call.1} parent=1 // pred_check
      _
    $region23: #{tpu_custom_call.1} parent=1 // pred_check_branch
      %141 = sbr.rel (0) target = $region25
    $region24: #{tpu_custom_call.1} parent=1 // pred_region
      %s143 = ssub.s32 256, 256
      %144 = vsyncadd [#allocation5], %s143
      %s145 = sshll.u32 [#allocation8], 4
      %s146 = int_to_ptr.vmem [resolvable:$true] %s145
      %151 = dma.vmem_to_hbm [thread:$0]  %s146, 256, %s3, [#allocation5], 128, 128, 8
    $region25: #{tpu_custom_call.1} parent=1 // pred_fallthru
      _
    // Predicated region
    $region26: #{tpu_custom_call.1} parent=1 // pred_check
      _
    $region27: #{tpu_custom_call.1} parent=1 // pred_check_branch
      %153 = sbr.rel (0) target = $region29
    $region28: #{tpu_custom_call.1} parent=1 // pred_region
      %154 = dma.done [#allocation5], 256
    $region29: #{tpu_custom_call.1} parent=1 // pred_fallthru
      _
    %155 = vsyncpa [#allocation4], 1
    %156 = vsyncpa [#allocation5], 1
    %157 = vsyncpa [#allocation6], 1

</llo_original>
